<compile_context>
chip_gen: v7x
topology: tpu7x:2x2x1
jax: 0.10.0
libtpu: 0.0.40
codegen_flags: <defaults>
</compile_context>

<pallas_src>
import math

import jax
import jax.numpy as jnp
from jax.experimental import pallas as pl
from jax.experimental.pallas import tpu as pltpu


# ----------------------------------------------------------------------------
# Parameter / buffer construction (matches nn.Module.__init__ exactly).
# ----------------------------------------------------------------------------
def make_pe_table(max_len: int, d_model: int, dtype=jnp.float32) -> jnp.ndarray:
    """pe[l, 2i] = sin(l * exp(-2i*ln(10000)/d)), pe[l, 2i+1] = cos(...)."""
    position = jnp.arange(0, max_len, dtype=jnp.float32)[:, None]           # (L, 1)
    div_term = jnp.exp(
        jnp.arange(0, d_model, 2, dtype=jnp.float32) * -(math.log(10000.0) / d_model)
    )                                                                        # (D/2,)
    angles = position * div_term                                             # (L, D/2)
    pe = jnp.zeros((max_len, d_model), dtype=dtype)
    pe = pe.at[:, 0::2].set(jnp.sin(angles).astype(dtype))
    pe = pe.at[:, 1::2].set(jnp.cos(angles).astype(dtype))
    return pe  # (max_len, d_model); torch adds two leading unsqueezes


# ----------------------------------------------------------------------------
# Pallas kernel body: out = x + pe (pe block is (1, L); sublane broadcast is a
# free VPU-side op relative to the HBM-bound DMA).
# ----------------------------------------------------------------------------
def _time_encoding_kernel(x_ref, pe_ref, o_ref):
    o_ref[...] = x_ref[...] + pe_ref[...]
    # TODO(synk): training-mode dropout (pltpu.prng_seed + pltpu.prng_random_bits
    # inverted-dropout mask) is not implemented; eval mode is the identity.


def _sublane_multiple(dtype) -> int:
    """Min sublane granularity per dtype: f32->8, bf16/f16->16, int8/fp8->32."""
    itemsize = jnp.dtype(dtype).itemsize
    return {4: 8, 2: 16, 1: 32}.get(itemsize, 8)


def _select_block_budget():
    """Generation-aware (target_block_bytes, vmem_limit_bytes)."""
    vmem_bytes = None
    try:
        vmem_bytes = getattr(pltpu.get_tpu_info(), "vmem_capacity_bytes", None)
    except Exception:
        vmem_bytes = None
    if vmem_bytes is not None and vmem_bytes >= 100 * 1024 * 1024:
        # v5e / v6e: 128 MiB VMEM -> 8 MiB blocks; 4x double-buffered ~= 32 MiB.
        return 8 * 1024 * 1024, 64 * 1024 * 1024
    # v7x (64 MiB per TensorCore) or unknown: stay conservative.
    return 4 * 1024 * 1024, 48 * 1024 * 1024


# ----------------------------------------------------------------------------
# Forward wrapper.
# ----------------------------------------------------------------------------
def time_encoding_forward(x: jnp.ndarray, pe_table: jnp.ndarray,
                          *, min_pallas_bytes: int = 256 * 1024) -> jnp.ndarray:
    """Pallas equivalent of TimeEncoding.forward(x) in eval mode.

    x: (B, C, S, D). Adds pe_table[S] (exactly `self.pe[:, :, x.size(2)]`) to
    every (b, c, s) position of x.
    """
    B, C, S, D = x.shape
    max_len = pe_table.shape[0]
    assert S < max_len, "sequence length must be < max_len (torch would IndexError)"

    # TODO(synk): torch would promote bf16 x + f32 pe to f32; here PE is cast to
    # x.dtype so the output keeps x.dtype (matches f32 exactly).
    pe_row = pe_table[S].astype(x.dtype)            # (D,) == self.pe[:, :, x.size(2)]

    dtype_bytes = jnp.dtype(x.dtype).itemsize
    sublane = _sublane_multiple(x.dtype)

    n_rows = B * C * S
    total_bytes = n_rows * D * dtype_bytes

    # ---- lane-dense fold: lane axis becomes a multiple of 128 ---------------
    k = math.lcm(D, 128) // D
    foldable = (n_rows % k == 0) and ((n_rows // k) % sublane == 0)

    if (not foldable) or (total_bytes <= min_pallas_bytes):
        # Tiny or non-foldable shapes: a fused XLA broadcast-add is already at
        # the HBM roofline (one read + one write); never drop to masked 32-lane
        # stores and never add wrapper pad/slice passes.
        return x + pe_row

    L = k * D
    n_rows2 = n_rows // k
    x2 = x.reshape(n_rows2, L)                       # free (bitcast) reshape under jit
    pe_block = jnp.tile(pe_row, (k,)).reshape(1, L)  # tiny (1, L) operand (~L*4 bytes)

    # ---- block sizing: generation-aware, sublane-aligned, exact divisor -----
    target_block_bytes, vmem_limit_bytes = _select_block_budget()
    rows_budget = max(sublane, target_block_bytes // (L * dtype_bytes))
    block_rows = min(rows_budget, n_rows2)
    block_rows = max(sublane, (block_rows // sublane) * sublane)
    # Prefer >= 2 grid steps so v7x's two TensorCores both stream.
    if n_rows2 > sublane and block_rows >= n_rows2:
        block_rows = max(sublane, ((n_rows2 // 2) // sublane) * sublane)
    # Shrink to the largest sublane multiple that exactly divides n_rows2:
    # no ragged tail, no pad, no slice.
    while block_rows > sublane and n_rows2 % block_rows != 0:
        block_rows -= sublane

    grid = (n_rows2 // block_rows,)

    out2 = pl.pallas_call(
        _time_encoding_kernel,
        out_shape=jax.ShapeDtypeStruct((n_rows2, L), x.dtype),
        grid_spec=pltpu.PrefetchScalarGridSpec(
            num_scalar_prefetch=0,
            grid=grid,
            in_specs=[
                pl.BlockSpec((block_rows, L), lambda i: (i, 0)),
                pl.BlockSpec((1, L), lambda i: (0, 0)),      # resident PE row
            ],
            out_specs=pl.BlockSpec((block_rows, L), lambda i: (i, 0)),
        ),
        compiler_params=pltpu.CompilerParams(
            dimension_semantics=("parallel",),
            vmem_limit_bytes=vmem_limit_bytes,
        ),
        cost_estimate=pl.CostEstimate(
            flops=n_rows2 * L,
            transcendentals=0,
            bytes_accessed=2 * n_rows2 * L * dtype_bytes + L * dtype_bytes,
        ),
    )(x2, pe_block)

    return out2.reshape(B, C, S, D)


# ----------------------------------------------------------------------------
# Demo / self-check.
# ----------------------------------------------------------------------------
if __name__ == "__main__":
    d_model = 32
    max_len = 100
    dropout_p = 0.1  # eval mode -> identity (matches module.eval())

    pe_table = make_pe_table(max_len, d_model)
    fwd = jax.jit(time_encoding_forward, static_argnames=("min_pallas_bytes",))

    key = jax.random.PRNGKey(0)
    k1, k2, k3 = jax.random.split(key, 3)

    # Case 1: tiny shape, force the Pallas path (bypass disabled).
    B, C, S = 2, 4, 8
    x1 = jax.random.normal(k1, (B, C, S, d_model), dtype=jnp.float32)
    out1 = jax.block_until_ready(fwd(x1, pe_table, min_pallas_bytes=0))
    ref1 = x1 + pe_table[S][None, None, None, :]
    assert out1.shape == x1.shape and out1.dtype == x1.dtype
    assert jnp.allclose(out1, ref1, atol=1e-6, rtol=1e-6), "mismatch (tiny Pallas path)"

    # Case 2: moderate shape, Pallas path with multi-step grid.
    B, C, S = 4, 16, 64
    x2 = jax.random.normal(k2, (B, C, S, d_model), dtype=jnp.float32)
    out2 = jax.block_until_ready(fwd(x2, pe_table))
    ref2 = x2 + pe_table[S][None, None, None, :]
    assert out2.shape == x2.shape and out2.dtype == x2.dtype
    assert jnp.allclose(out2, ref2, atol=1e-6, rtol=1e-6), "mismatch (Pallas path)"

    # Case 3: ragged shape (rows not divisible by fold factor) -> XLA fallback.
    B, C, S = 2, 3, 5
    x3 = jax.random.normal(k3, (B, C, S, d_model), dtype=jnp.float32)
    out3 = jax.block_until_ready(fwd(x3, pe_table))
    ref3 = x3 + pe_table[S][None, None, None, :]
    assert jnp.allclose(out3, ref3, atol=1e-6, rtol=1e-6), "mismatch (fallback path)"

    print("KERNEL_OK")
</pallas_src>

<mosaic_0001>
module attributes {stable_mosaic.version = 11 : i64} {
  func.func @_time_encoding_kernel(%arg0: i32, %arg1: memref<8x128xf32, #tpu.memory_space<vmem>>, %arg2: memref<1x128xf32, #tpu.memory_space<vmem>>, %arg3: memref<8x128xf32, #tpu.memory_space<vmem>>) attributes {dimension_semantics = [#tpu.dimension_semantics<parallel>], iteration_bounds = array<i64: 2>, scalar_prefetch = 0 : i64, scratch_operands = 0 : i64, tpu.core_type = #tpu.core_type<tc>, window_params = [{transform_indices = @transform_0, window_bounds = array<i64: 8, 128>}, {pipeline_mode = #tpu.pipeline_mode<synchronous>, transform_indices = @transform_1, window_bounds = array<i64: 1, 128>}, {transform_indices = @transform_2, window_bounds = array<i64: 8, 128>}]} {
    %c0 = arith.constant 0 : index
    %c0_0 = arith.constant 0 : index
    %0 = vector.load %arg1[%c0, %c0_0] : memref<8x128xf32, #tpu.memory_space<vmem>>, vector<8x128xf32>
    %c0_1 = arith.constant 0 : index
    %c0_2 = arith.constant 0 : index
    %1 = vector.load %arg2[%c0_1, %c0_2] : memref<1x128xf32, #tpu.memory_space<vmem>>, vector<1x128xf32>
    %2 = vector.broadcast %1 : vector<1x128xf32> to vector<8x128xf32>
    %3 = arith.addf %0, %2 : vector<8x128xf32>
    %c0_3 = arith.constant 0 : index
    %c0_4 = arith.constant 0 : index
    %4 = vector.load %arg3[%c0_3, %c0_4] : memref<8x128xf32, #tpu.memory_space<vmem>>, vector<8x128xf32>
    tpu.vector_store %arg3[%c0_3, %c0_4], %3 {strides = array<i32>} : memref<8x128xf32, #tpu.memory_space<vmem>>, vector<8x128xf32>,
    return
  }
  func.func @transform_0(%arg0: i32) -> (i32, i32) {
    %c0_i32 = arith.constant 0 : i32
    %c0_i32_0 = arith.constant 0 : i32
    return %arg0, %c0_i32 : i32, i32
  }
  func.func @transform_1(%arg0: i32) -> (i32, i32) {
    %c0_i32 = arith.constant 0 : i32
    %c0_i32_0 = arith.constant 0 : i32
    %c0_i32_1 = arith.constant 0 : i32
    return %c0_i32, %c0_i32_0 : i32, i32
  }
  func.func @transform_2(%arg0: i32) -> (i32, i32) {
    %c0_i32 = arith.constant 0 : i32
    %c0_i32_0 = arith.constant 0 : i32
    return %arg0, %c0_i32 : i32, i32
  }
}

</mosaic_0001>

<llo_original>
// kernel: tile.7
$region0: #{tile.7}
  %s0 = inlined_call_operand.vmem [shape: f32[4,32], index: 0, kind: input, shape index: {}]
  %s1 = inlined_call_operand.vmem [shape: f32[1,128], index: 1, kind: output, shape index: {}]
  $region1: #{tile.7} parent=0
    #allocation0 [shape = 'u8[4096]{0}', space=vmem, size = 0x1000, scoped, tag = 'scoped mem for output reshape']
    #allocation1 [shape = 'u8[4096]{0}', space=vmem, size = 0x1000, scoped, tag = 'scoped mem for input reshape']
    %s3 = sshllo.u32 0, 4
    %v4 = vld [vmem:[%s0] sm:%s3]
    %5 = vst [vmem:[#allocation1] sm:%s3] %v4
    %v6 = vld [vmem:[#allocation1] sm:$0x1]
    %vm7 = vcmask 261120
    %8 = vst.msk [vmem:[#allocation0] sm:$0x1] %vm7, %v6
    %s9 = scalar_lea.vmem [#allocation1], 3
    %v10 = vld [vmem:[%s9] sm:$0x1]
    %11 = vrot.lane.b32.xlu0 %v10, 96
    %v12 = vpop.permute.xlu0 %11
    %vm13 = vcmask 1048320
    %14 = vst.msk [vmem:[#allocation0] sm:$0x1] %vm13, %v12
    %s15 = scalar_lea.vmem [#allocation1], 2
    %v16 = vld [vmem:[%s15] sm:$0x1]
    %17 = vrot.lane.b32.xlu0 %v16, 64
    %v18 = vpop.permute.xlu0 %17
    %vm19 = vcmask 785920
    %20 = vst.msk [vmem:[#allocation0] sm:$0x1] %vm19, %v18
    %s21 = scalar_lea.vmem [#allocation1], 1
    %v22 = vld [vmem:[%s21] sm:$0x1]
    %23 = vrot.lane.b32.xlu0 %v22, 32
    %v24 = vpop.permute.xlu0 %23
    %vm25 = vcmask 523520
    %26 = vst.msk [vmem:[#allocation0] sm:$0x1] %vm25, %v24
    %s28 = sshllo.u32 0, 1
    %v30 = vld [vmem:[#allocation0] sm:%s28]
    %s31 = sshllo.u32 0, 1
    %32 = vst [vmem:[%s1] sm:%s31] %v30

// kernel: tile.6
$region0: #{tile.6}
  #allocation0 [shape = 's32[1]{0}', space=sflag, size = 0x4, scoped, tag = 'scoped memory for tile.6']
  %s0 = inlined_call_operand.vmem [shape: f32[32], index: 0, kind: input, shape index: {}]
  %s1 = inlined_call_operand.vmem [shape: f32[4,32], index: 1, kind: output, shape index: {}]
  // Predicated region
  $region2: #{tile.6} parent=0 // pred_check
    _
  $region3: #{tile.6} parent=0 // pred_check_branch
    %3 = sbr.rel (0) target = $region5
  $region4: #{tile.6} parent=0 // pred_region
    _
  $region5: #{tile.6} parent=0 // pred_fallthru
    _
  %v4 = vld [vmem:[%s0] ss:$0 sm:$0xff]
  %5 = vst [vmem:[%s1] sm:$0xf] %v4

// kernel: time_encoding_forward.1
$region0: #{time_encoding_forward.1}
  #allocation0 [shape = 'u32[]', space=smem, size = 0x4, offset = 0x4, fixed_abs, tag = 'smem constant byte address 0x4 - core index']
  #allocation1 [shape = 'u32[144,128]{1,0:T(1,128)}', space=vmem, size = 0x12000, scoped, tag = 'internal scratch']
  %s0 = inlined_call_operand.vmem [shape: f32[16,128], index: 0, kind: input, shape index: {}]
  %s1 = inlined_call_operand.vmem [shape: f32[1,128], index: 1, kind: input, shape index: {}]
  %s2 = inlined_call_operand.vmem [shape: f32[16,128], index: 2, kind: output, shape index: {}]
  %s3 = sld [smem:[#allocation0]]
  $region41: #{time_encoding_forward.1} parent=0
    _
  %s5 = ssub.s32 1, %s3
  %s6 = scalar_select 0, %s5, %s3
  loop: start=0, step=1, limit=4
  $region2: #{time_encoding_forward.1} parent=0 // loop_pre_header
    _
  $region3: #{time_encoding_forward.1} parent=0 // loop_header
    %s8 = sphi 0, %s12
    %p9 = scmp.ge.s32.totalorder %s8, 4
    %s18 = sphi 0, %s20
    %s21 = sphi 0, %s18
    %s22 = sphi 0, %s21
    %s38 = sphi 0, %s22
    %s42 = sphi 0, %s42
    %s44 = sphi 0, %s42
    %s45 = sphi 0, %s44
    %s59 = sphi 0, %s45
    %s65 = sphi 0, %s67
    %s68 = sphi 0, %s65
    %s69 = sphi 0, %s68
    %s85 = sphi 0, %s69
  $region4: #{time_encoding_forward.1} parent=0 // loop_header_branch
    %11 = sbr.rel (%p9) target = $region8
  $region5: #{time_encoding_forward.1} parent=0 // loop_body
    %s13 = ssub.s32 %s8, 1
    %s14 = ssub.s32 %s8, 2
    %s15 = sadd.s32 %s8, 1
    %s16 = ssub.s32 %s8, %s15
    %p17 = scmp.eq.s32.totalorder %s16, 0
    %s19 = sadd.s32 %s18, 1
    %s20 = scalar_select %p17, %s18, %s19
    %p23 = pneg %p17
    %p24 = scmp.eq.s32.totalorder %s8, 1
    %p25 = por %p23, %p24
    %p26 = scmp.ne.s32.totalorder %s18, %s21
    %p27 = scmp.eq.s32.totalorder %s8, 0
    %p28 = por %p26, %p27
    %p29 = scmp.ne.s32.totalorder %s18, %s21
    %p30 = scmp.eq.s32.totalorder %s13, 1
    %p31 = por %p29, %p30
    %p32 = scmp.ne.s32.totalorder %s21, %s22
    %p33 = scmp.eq.s32.totalorder %s13, 0
    %p34 = por %p32, %p33
    %p35 = scmp.ne.s32.totalorder %s21, %s22
    %p36 = scmp.eq.s32.totalorder %s14, 1
    %p37 = por %p35, %p36
    %p39 = scmp.ne.s32.totalorder %s22, %s38
    %p40 = scmp.eq.s32.totalorder %s14, 0
    %p41 = por %p39, %p40
    %s43 = sadd.s32 %s42, 1
    %p46 = scmp.eq.s32.totalorder %s8, 1
    %p47 = scmp.ne.s32.totalorder %s42, %s44
    %p48 = scmp.eq.s32.totalorder %s8, 0
    %p49 = por %p47, %p48
    %p50 = scmp.ne.s32.totalorder %s42, %s44
    %p51 = scmp.eq.s32.totalorder %s13, 1
    %p52 = por %p50, %p51
    %p53 = scmp.ne.s32.totalorder %s44, %s45
    %p54 = scmp.eq.s32.totalorder %s13, 0
    %p55 = por %p53, %p54
    %p56 = scmp.ne.s32.totalorder %s44, %s45
    %p57 = scmp.eq.s32.totalorder %s14, 1
    %p58 = por %p56, %p57
    %p60 = scmp.ne.s32.totalorder %s45, %s59
    %p61 = scmp.eq.s32.totalorder %s14, 0
    %p62 = por %p60, %p61
    %s63 = ssub.s32 %s8, %s15
    %p64 = scmp.eq.s32.totalorder %s63, 0
    %s66 = sadd.s32 %s65, 1
    %s67 = scalar_select %p64, %s65, %s66
    %p70 = pneg %p64
    %p71 = scmp.eq.s32.totalorder %s8, 1
    %p72 = por %p70, %p71
    %p73 = scmp.ne.s32.totalorder %s65, %s68
    %p74 = scmp.eq.s32.totalorder %s8, 0
    %p75 = por %p73, %p74
    %p76 = scmp.ne.s32.totalorder %s65, %s68
    %p77 = scmp.eq.s32.totalorder %s13, 1
    %p78 = por %p76, %p77
    %p79 = scmp.ne.s32.totalorder %s68, %s69
    %p80 = scmp.eq.s32.totalorder %s13, 0
    %p81 = por %p79, %p80
    %p82 = scmp.ne.s32.totalorder %s68, %s69
    %p83 = scmp.eq.s32.totalorder %s14, 1
    %p84 = por %p82, %p83
    %p86 = scmp.ne.s32.totalorder %s69, %s85
    %p87 = scmp.eq.s32.totalorder %s14, 0
    %p88 = por %p86, %p87
    %p89 = scmp.le.s32.totalorder 1, %s8
    %p90 = scmp.lt.s32.totalorder %s8, 3
    %p91 = pnand %p89, %p90
    %p92 = pneg %p91
    // Predicated region
    $region9: #{time_encoding_forward.1} parent=5 // pred_check
      _
    $region10: #{time_encoding_forward.1} parent=5 // pred_check_branch
      %94 = sbr.rel (%p91) target = $region12
    $region11: #{time_encoding_forward.1} parent=5 // pred_region
      %s95 = ssub.s32 %s8, 1
      // Predicated region
      $region13: #{time_encoding_forward.1} parent=11 // pred_check
        %p96 = pneg %p55
      $region14: #{time_encoding_forward.1} parent=11 // pred_check_branch
        %98 = sbr.rel (%p96) target = $region16
      $region15: #{time_encoding_forward.1} parent=11 // pred_region
        _
      $region16: #{time_encoding_forward.1} parent=11 // pred_fallthru
        _
    $region12: #{time_encoding_forward.1} parent=5 // pred_fallthru
      _
    %p99 = scmp.lt.s32.totalorder %s8, 2
    // Predicated region
    $region17: #{time_encoding_forward.1} parent=5 // pred_check
      %p100 = pneg %p99
    $region18: #{time_encoding_forward.1} parent=5 // pred_check_branch
      %102 = sbr.rel (%p100) target = $region20
    $region19: #{time_encoding_forward.1} parent=5 // pred_region
      // Predicated region
      $region21: #{time_encoding_forward.1} parent=19 // pred_check
        %p103 = pneg %p28
      $region22: #{time_encoding_forward.1} parent=19 // pred_check_branch
        %105 = sbr.rel (%p103) target = $region24
      $region23: #{time_encoding_forward.1} parent=19 // pred_region
        %p106 = scmp.lt.s32.totalorder %s8, 1
        %s107 = scalar_select %p106, %s8, 1
        %s108 = smul.addr %s107, 8
        %s109 = scalar_lea.vmem %s0, %s108
      $region24: #{time_encoding_forward.1} parent=19 // pred_fallthru
        _
    $region20: #{time_encoding_forward.1} parent=5 // pred_fallthru
      _
    %p110 = scmp.le.s32.totalorder 1, %s8
    %p111 = scmp.lt.s32.totalorder %s8, 3
    %p112 = pnand %p110, %p111
    %p113 = pneg %p112
    // Predicated region
    $region25: #{time_encoding_forward.1} parent=5 // pred_check
      _
    $region26: #{time_encoding_forward.1} parent=5 // pred_check_branch
      %115 = sbr.rel (%p112) target = $region28
    $region27: #{time_encoding_forward.1} parent=5 // pred_region
      %s116 = ssub.s32 %s8, 1
      %p117 = scmp.lt.s32.totalorder %s13, 1
      %s118 = scalar_select %p117, %s13, 1
      %s119 = smul.addr %s118, 8
      %s120 = scalar_lea.vmem %s0, %s119
      %p121 = pneg %p34
      %p122 = pneg %p31
      %p123 = pneg %p55
      %p124 = pneg %p52
      %p125 = pneg %p81
      %p126 = pneg %p78
      %p127 = scmp.lt.s32.totalorder %s13, 1
      %s128 = scalar_select %p127, %s13, 1
      %s129 = smul.addr %s128, 8
      %s130 = scalar_lea.vmem %s2, %s129
      %p131 = scmp.lt.s32.totalorder %s13, 1
      %s132 = scalar_select %p131, %s13, 1
      %s133 = smul.addr %s132, 8
      %s134 = scalar_lea.vmem %s0, %s133
      %p135 = scmp.lt.s32.totalorder %s13, 1
      %s136 = scalar_select %p135, %s13, 1
      %s137 = smul.addr %s136, 8
      %s138 = scalar_lea.vmem %s2, %s137
      %v139 = vld [vmem:[%s134] sm:$0xff]
      %v140 = vld [vmem:[%s1] sm:$0x1]
      %v142 = vlaneseq
      %v143 = vshrl.u32 %v142, 7
      %v144 = vsub.s32 0, %v143
      %v145 = vrot.slane %v140, %v144
      %v147 = vadd.f32 %v139, %v145
      %148 = vst [vmem:[%s138] sm:$0xff] %v147
      %p149 = scmp.lt.s32.totalorder %s13, 1
      %s150 = scalar_select %p149, %s13, 1
      %s151 = smul.addr %s150, 8
      %s152 = scalar_lea.vmem %s2, %s151
      // Predicated region
      $region29: #{time_encoding_forward.1} parent=27 // pred_check
        %p153 = pneg %p78
      $region30: #{time_encoding_forward.1} parent=27 // pred_check_branch
        %155 = sbr.rel (%p153) target = $region32
      $region31: #{time_encoding_forward.1} parent=27 // pred_region
        _
      $region32: #{time_encoding_forward.1} parent=27 // pred_fallthru
        _
    $region28: #{time_encoding_forward.1} parent=5 // pred_fallthru
      _
    %p156 = scmp.le.s32.totalorder 2, %s8
    // Predicated region
    $region33: #{time_encoding_forward.1} parent=5 // pred_check
      %p157 = pneg %p156
    $region34: #{time_encoding_forward.1} parent=5 // pred_check_branch
      %159 = sbr.rel (%p157) target = $region36
    $region35: #{time_encoding_forward.1} parent=5 // pred_region
      %s160 = ssub.s32 %s8, 2
      // Predicated region
      $region37: #{time_encoding_forward.1} parent=35 // pred_check
        %p161 = pneg %p84
      $region38: #{time_encoding_forward.1} parent=35 // pred_check_branch
        %163 = sbr.rel (%p161) target = $region40
      $region39: #{time_encoding_forward.1} parent=35 // pred_region
        %p164 = scmp.lt.s32.totalorder %s14, 1
        %s165 = scalar_select %p164, %s14, 1
        %s166 = smul.addr %s165, 8
        %s167 = scalar_lea.vmem %s2, %s166
      $region40: #{time_encoding_forward.1} parent=35 // pred_fallthru
        _
    $region36: #{time_encoding_forward.1} parent=5 // pred_fallthru
      _
  $region6: #{time_encoding_forward.1} parent=0 // loop_footer
    %s12 = sadd.s32 1, %s8
  $region7: #{time_encoding_forward.1} parent=0 // loop_footer_branch
    %7 = sbr.rel target = $region3
  $region8: #{time_encoding_forward.1} parent=0 // loop_exit
    _

</llo_original>
